<compile_context>
chip_gen: v5e
topology: v5e:2x2
jax: 0.10.0
libtpu: 0.0.40
codegen_flags: <defaults>
</compile_context>

<pallas_src>
import jax
import jax.numpy as jnp
from jax import lax
from jax.experimental import pallas as pl
from jax.experimental.pallas import tpu as pltpu  # kept for parity / future scratch use

V = 50    # vocab_size
E = 16    # embedding_dim
H = 32    # hidden_size
A = 16    # attention_layer_param
B = 2     # batch
S = 8     # sequence length
PAD = 0   # padding_idx


def attn_encoder_kernel(ids_ref,   # (S*B, 1) int32 token ids, time-major flat (row = t*B + b)
                        emb_ref,   # (V, E)   embedding table (row PAD == 0)
                        wt_ref,    # (E, H)   translate weight^T
                        bt_ref,    # (1, H)   translate bias
                        wih_ref,   # (H, 4H)  LSTM W_ih^T (gate order i,f,g,o)
                        whh_ref,   # (H, 4H)  LSTM W_hh^T
                        bl_ref,    # (1, 4H)  b_ih + b_hh
                        ws_ref,    # (H, A)   attention Ws^T
                        wa_ref,    # (A, 1)   attention Wa^T
                        out_ref):  # (1, B, H) output `cont`
    SB = S * B

    # ---------- batched input path (hoisted off the recurrence) ----------
    ids = ids_ref[...]                                                   # (SB, 1) int32
    onehot = (ids == lax.broadcasted_iota(jnp.int32, (SB, V), 1)
              ).astype(jnp.float32)                                      # (SB, V)
    emb = jnp.dot(onehot, emb_ref[...],
                  preferred_element_type=jnp.float32)                    # (SB, E)
    x = jnp.maximum(
        jnp.dot(emb, wt_ref[...], preferred_element_type=jnp.float32)
        + bt_ref[...], 0.0)                                              # (SB, H)
    gates_x = (jnp.dot(x, wih_ref[...], preferred_element_type=jnp.float32)
               + bl_ref[...])                                            # (SB, 4H)

    whh = whh_ref[...]                                                   # (H, 4H) held in vregs

    # ---------- recurrence: only h @ W_hh + elementwise per step ----------
    h = jnp.zeros((B, H), jnp.float32)
    c = jnp.zeros((B, H), jnp.float32)
    hs = []
    for t in range(S):   # S static -> fully unrolled, static slices into gates_x
        gates = gates_x[t * B:(t + 1) * B, :] + jnp.dot(
            h, whh, preferred_element_type=jnp.float32)                  # (B, 4H)
        sig = jax.nn.sigmoid(gates)   # one full-width EUP pass
        tnh = jnp.tanh(gates)         # one full-width EUP pass
        i_g = sig[:, 0:H]
        f_g = sig[:, H:2 * H]
        o_g = sig[:, 3 * H:4 * H]
        g_g = tnh[:, 2 * H:3 * H]
        c = f_g * c + i_g * g_g
        h = o_g * jnp.tanh(c)
        hs.append(h)

    # ---------- attention (batched, post-loop) ----------
    all_h = jnp.concatenate(hs, axis=0)                                  # (SB, H), row = t*B+b
    scores = jnp.dot(
        jnp.tanh(jnp.dot(all_h, ws_ref[...],
                         preferred_element_type=jnp.float32)),
        wa_ref[...], preferred_element_type=jnp.float32)                 # (SB, 1)
    # lane-dense (B, S) scores; softmax over the sequence axis
    # (matches F.softmax's implicit dim=0 on the (S, B, 1) score tensor)
    scores_bs = jnp.concatenate(
        [scores[t * B:(t + 1) * B, :] for t in range(S)], axis=1)        # (B, S)
    m = jnp.max(scores_bs, axis=1, keepdims=True)
    e = jnp.exp(scores_bs - m)
    attn = e * pl.reciprocal(jnp.sum(e, axis=1, keepdims=True),
                             approx=True)                                # (B, S)

    # cont[b, :] = sum_t attn[b, t] * h_t[b, :]
    cont = jnp.zeros((B, H), jnp.float32)
    for t in range(S):
        cont = cont + attn[:, t:t + 1] * hs[t]
    out_ref[...] = cont[None, :, :]


def attn_encoder(ids, params):
    """ids: (B, S) int32 token ids. Returns (1, B, H) float32."""
    # time-major flat id layout: row t*B + b == ids[b, t]
    ids_flat = jnp.transpose(ids, (1, 0)).astype(jnp.int32).reshape(S * B, 1)
    return pl.pallas_call(
        attn_encoder_kernel,
        out_shape=jax.ShapeDtypeStruct((1, B, H), jnp.float32),
    )(ids_flat, params['emb'], params['wt'], params['bt'],
      params['wih'], params['whh'], params['bl'],
      params['ws'], params['wa'])


def init_params(key):
    ks = jax.random.split(key, 8)
    emb = 0.1 * jax.random.normal(ks[0], (V, E), jnp.float32)
    emb = emb.at[PAD].set(0.0)            # nn.Embedding padding_idx row is zero
    return dict(
        emb=emb,
        wt=0.1 * jax.random.normal(ks[1], (E, H), jnp.float32),
        bt=0.1 * jax.random.normal(ks[2], (1, H), jnp.float32),
        wih=0.1 * jax.random.normal(ks[3], (H, 4 * H), jnp.float32),
        whh=0.1 * jax.random.normal(ks[4], (H, 4 * H), jnp.float32),
        bl=0.1 * jax.random.normal(ks[5], (1, 4 * H), jnp.float32),  # b_ih + b_hh
        ws=0.1 * jax.random.normal(ks[6], (H, A), jnp.float32),
        wa=0.1 * jax.random.normal(ks[7], (A, 1), jnp.float32),
    )


def reference(ids, p):
    """Pure-JAX replica of the PyTorch forward for validation."""
    emb = p['emb'][ids]                                        # (B, S, E)
    x = jnp.maximum(emb @ p['wt'] + p['bt'][0], 0.0)           # (B, S, H)
    x = jnp.transpose(x, (1, 0, 2))                            # (S, B, H)

    def cell(carry, x_t):
        h, c = carry
        gates = x_t @ p['wih'] + h @ p['whh'] + p['bl'][0]
        i = jax.nn.sigmoid(gates[:, 0:H])
        f = jax.nn.sigmoid(gates[:, H:2 * H])
        g = jnp.tanh(gates[:, 2 * H:3 * H])
        o = jax.nn.sigmoid(gates[:, 3 * H:4 * H])
        c = f * c + i * g
        h = o * jnp.tanh(c)
        return (h, c), h

    init = (jnp.zeros((B, H), jnp.float32), jnp.zeros((B, H), jnp.float32))
    _, all_ = lax.scan(cell, init, x)                          # (S, B, H)
    scores = jnp.tanh(all_ @ p['ws']) @ p['wa']                # (S, B, 1)
    attn = jax.nn.softmax(scores, axis=0)                      # softmax over seq
    cont = jnp.sum(attn * all_, axis=0)                        # (B, H)
    return cont[None]                                          # (1, B, H)


if __name__ == "__main__":
    key = jax.random.PRNGKey(0)
    kp, ki = jax.random.split(key)
    params = init_params(kp)
    ids = jax.random.randint(ki, (B, S), 0, V, dtype=jnp.int32)

    out = attn_encoder(ids, params)
    out = jax.block_until_ready(out)
    assert out.shape == (1, B, H), out.shape

    ref = reference(ids, params)
    err = float(jnp.max(jnp.abs(out - ref)))
    # tolerance slightly above 1e-3 to allow for the EUP approximate reciprocal
    # used in the softmax normalization.
    if err > 2e-3:
        raise AssertionError(f"kernel/reference mismatch, max abs err = {err}")
    print("KERNEL_OK")
</pallas_src>

<mosaic_0001>
module attributes {stable_mosaic.version = 11 : i64} {
  func.func @attn_encoder_kernel(%arg0: memref<16x1xi32, #tpu.memory_space<vmem>>, %arg1: memref<50x16xf32, #tpu.memory_space<vmem>>, %arg2: memref<16x32xf32, #tpu.memory_space<vmem>>, %arg3: memref<1x32xf32, #tpu.memory_space<vmem>>, %arg4: memref<32x128xf32, #tpu.memory_space<vmem>>, %arg5: memref<32x128xf32, #tpu.memory_space<vmem>>, %arg6: memref<1x128xf32, #tpu.memory_space<vmem>>, %arg7: memref<32x16xf32, #tpu.memory_space<vmem>>, %arg8: memref<16x1xf32, #tpu.memory_space<vmem>>, %arg9: memref<1x2x32xf32, #tpu.memory_space<vmem>>) attributes {dimension_semantics = [], scalar_prefetch = 0 : i64, scratch_operands = 0 : i64, tpu.core_type = #tpu.core_type<tc>} {
    %c0 = arith.constant 0 : index
    %c0_0 = arith.constant 0 : index
    %0 = vector.load %arg0[%c0, %c0_0] : memref<16x1xi32, #tpu.memory_space<vmem>>, vector<16x1xi32>
    %1 = tpu.iota {dimensions = array<i32: 1>} : vector<16x50xi32>
    %2 = vector.broadcast %0 : vector<16x1xi32> to vector<16x50xi32>
    %3 = arith.cmpi eq, %2, %1 : vector<16x50xi32>
    %4 = arith.extui %3 : vector<16x50xi1> to vector<16x50xi32>
    %5 = arith.sitofp %4 : vector<16x50xi32> to vector<16x50xf32>
    %c0_1 = arith.constant 0 : index
    %c0_2 = arith.constant 0 : index
    %6 = vector.load %arg1[%c0_1, %c0_2] : memref<50x16xf32, #tpu.memory_space<vmem>>, vector<50x16xf32>
    %cst = arith.constant dense<0.000000e+00> : vector<16x16xf32>
    %7 = tpu.matmul %5, %6, %cst {dimension_numbers = #tpu.dot_dimension_numbers<[1], [0], [0], [1], [0, 0, 1, 1], [], []>} : vector<16x50xf32>, vector<50x16xf32>, vector<16x16xf32> -> vector<16x16xf32>
    %c0_3 = arith.constant 0 : index
    %c0_4 = arith.constant 0 : index
    %8 = vector.load %arg2[%c0_3, %c0_4] : memref<16x32xf32, #tpu.memory_space<vmem>>, vector<16x32xf32>
    %cst_5 = arith.constant dense<0.000000e+00> : vector<16x32xf32>
    %9 = tpu.matmul %7, %8, %cst_5 {dimension_numbers = #tpu.dot_dimension_numbers<[1], [0], [0], [1], [0, 0, 1, 1], [], []>} : vector<16x16xf32>, vector<16x32xf32>, vector<16x32xf32> -> vector<16x32xf32>
    %c0_6 = arith.constant 0 : index
    %c0_7 = arith.constant 0 : index
    %10 = vector.load %arg3[%c0_6, %c0_7] : memref<1x32xf32, #tpu.memory_space<vmem>>, vector<1x32xf32>
    %11 = vector.broadcast %10 : vector<1x32xf32> to vector<16x32xf32>
    %12 = arith.addf %9, %11 : vector<16x32xf32>
    %cst_8 = arith.constant 0.000000e+00 : f32
    %13 = vector.broadcast %cst_8 : f32 to vector<16x32xf32>
    %14 = arith.maximumf %12, %13 : vector<16x32xf32>
    %c0_9 = arith.constant 0 : index
    %c0_10 = arith.constant 0 : index
    %15 = vector.load %arg4[%c0_9, %c0_10] : memref<32x128xf32, #tpu.memory_space<vmem>>, vector<32x128xf32>
    %cst_11 = arith.constant dense<0.000000e+00> : vector<16x128xf32>
    %16 = tpu.matmul %14, %15, %cst_11 {dimension_numbers = #tpu.dot_dimension_numbers<[1], [0], [0], [1], [0, 0, 1, 1], [], []>} : vector<16x32xf32>, vector<32x128xf32>, vector<16x128xf32> -> vector<16x128xf32>
    %c0_12 = arith.constant 0 : index
    %c0_13 = arith.constant 0 : index
    %17 = vector.load %arg6[%c0_12, %c0_13] : memref<1x128xf32, #tpu.memory_space<vmem>>, vector<1x128xf32>
    %18 = vector.broadcast %17 : vector<1x128xf32> to vector<16x128xf32>
    %19 = arith.addf %16, %18 : vector<16x128xf32>
    %c0_14 = arith.constant 0 : index
    %c0_15 = arith.constant 0 : index
    %20 = vector.load %arg5[%c0_14, %c0_15] : memref<32x128xf32, #tpu.memory_space<vmem>>, vector<32x128xf32>
    %cst_16 = arith.constant 0.000000e+00 : f32
    %21 = vector.broadcast %cst_16 : f32 to vector<2x32xf32>
    %cst_17 = arith.constant 0.000000e+00 : f32
    %22 = vector.broadcast %cst_17 : f32 to vector<2x32xf32>
    %23 = vector.extract_strided_slice %19 {offsets = [0, 0], sizes = [2, 128], strides = [1, 1]} : vector<16x128xf32> to vector<2x128xf32>
    %cst_18 = arith.constant dense<0.000000e+00> : vector<2x128xf32>
    %24 = tpu.matmul %21, %20, %cst_18 {dimension_numbers = #tpu.dot_dimension_numbers<[1], [0], [0], [1], [0, 0, 1, 1], [], []>} : vector<2x32xf32>, vector<32x128xf32>, vector<2x128xf32> -> vector<2x128xf32>
    %25 = arith.addf %23, %24 : vector<2x128xf32>
    %26 = arith.negf %25 : vector<2x128xf32>
    %27 = math.exp %26 : vector<2x128xf32>
    %cst_19 = arith.constant 1.000000e+00 : f32
    %28 = vector.broadcast %cst_19 : f32 to vector<2x128xf32>
    %29 = arith.addf %28, %27 : vector<2x128xf32>
    %30 = arith.divf %28, %29 : vector<2x128xf32>
    %31 = math.tanh %25 : vector<2x128xf32>
    %32 = vector.extract_strided_slice %30 {offsets = [0, 0], sizes = [2, 32], strides = [1, 1]} : vector<2x128xf32> to vector<2x32xf32>
    %33 = vector.extract_strided_slice %30 {offsets = [0, 32], sizes = [2, 32], strides = [1, 1]} : vector<2x128xf32> to vector<2x32xf32>
    %34 = vector.extract_strided_slice %30 {offsets = [0, 96], sizes = [2, 32], strides = [1, 1]} : vector<2x128xf32> to vector<2x32xf32>
    %35 = vector.extract_strided_slice %31 {offsets = [0, 64], sizes = [2, 32], strides = [1, 1]} : vector<2x128xf32> to vector<2x32xf32>
    %36 = arith.mulf %33, %22 : vector<2x32xf32>
    %37 = arith.mulf %32, %35 : vector<2x32xf32>
    %38 = arith.addf %36, %37 : vector<2x32xf32>
    %39 = math.tanh %38 : vector<2x32xf32>
    %40 = arith.mulf %34, %39 : vector<2x32xf32>
    %41 = vector.extract_strided_slice %19 {offsets = [2, 0], sizes = [2, 128], strides = [1, 1]} : vector<16x128xf32> to vector<2x128xf32>
    %cst_20 = arith.constant dense<0.000000e+00> : vector<2x128xf32>
    %42 = tpu.matmul %40, %20, %cst_20 {dimension_numbers = #tpu.dot_dimension_numbers<[1], [0], [0], [1], [0, 0, 1, 1], [], []>} : vector<2x32xf32>, vector<32x128xf32>, vector<2x128xf32> -> vector<2x128xf32>
    %43 = arith.addf %41, %42 : vector<2x128xf32>
    %44 = arith.negf %43 : vector<2x128xf32>
    %45 = math.exp %44 : vector<2x128xf32>
    %cst_21 = arith.constant 1.000000e+00 : f32
    %46 = vector.broadcast %cst_21 : f32 to vector<2x128xf32>
    %47 = arith.addf %46, %45 : vector<2x128xf32>
    %48 = arith.divf %46, %47 : vector<2x128xf32>
    %49 = math.tanh %43 : vector<2x128xf32>
    %50 = vector.extract_strided_slice %48 {offsets = [0, 0], sizes = [2, 32], strides = [1, 1]} : vector<2x128xf32> to vector<2x32xf32>
    %51 = vector.extract_strided_slice %48 {offsets = [0, 32], sizes = [2, 32], strides = [1, 1]} : vector<2x128xf32> to vector<2x32xf32>
    %52 = vector.extract_strided_slice %48 {offsets = [0, 96], sizes = [2, 32], strides = [1, 1]} : vector<2x128xf32> to vector<2x32xf32>
    %53 = vector.extract_strided_slice %49 {offsets = [0, 64], sizes = [2, 32], strides = [1, 1]} : vector<2x128xf32> to vector<2x32xf32>
    %54 = arith.mulf %51, %38 : vector<2x32xf32>
    %55 = arith.mulf %50, %53 : vector<2x32xf32>
    %56 = arith.addf %54, %55 : vector<2x32xf32>
    %57 = math.tanh %56 : vector<2x32xf32>
    %58 = arith.mulf %52, %57 : vector<2x32xf32>
    %59 = vector.extract_strided_slice %19 {offsets = [4, 0], sizes = [2, 128], strides = [1, 1]} : vector<16x128xf32> to vector<2x128xf32>
    %cst_22 = arith.constant dense<0.000000e+00> : vector<2x128xf32>
    %60 = tpu.matmul %58, %20, %cst_22 {dimension_numbers = #tpu.dot_dimension_numbers<[1], [0], [0], [1], [0, 0, 1, 1], [], []>} : vector<2x32xf32>, vector<32x128xf32>, vector<2x128xf32> -> vector<2x128xf32>
    %61 = arith.addf %59, %60 : vector<2x128xf32>
    %62 = arith.negf %61 : vector<2x128xf32>
    %63 = math.exp %62 : vector<2x128xf32>
    %cst_23 = arith.constant 1.000000e+00 : f32
    %64 = vector.broadcast %cst_23 : f32 to vector<2x128xf32>
    %65 = arith.addf %64, %63 : vector<2x128xf32>
    %66 = arith.divf %64, %65 : vector<2x128xf32>
    %67 = math.tanh %61 : vector<2x128xf32>
    %68 = vector.extract_strided_slice %66 {offsets = [0, 0], sizes = [2, 32], strides = [1, 1]} : vector<2x128xf32> to vector<2x32xf32>
    %69 = vector.extract_strided_slice %66 {offsets = [0, 32], sizes = [2, 32], strides = [1, 1]} : vector<2x128xf32> to vector<2x32xf32>
    %70 = vector.extract_strided_slice %66 {offsets = [0, 96], sizes = [2, 32], strides = [1, 1]} : vector<2x128xf32> to vector<2x32xf32>
    %71 = vector.extract_strided_slice %67 {offsets = [0, 64], sizes = [2, 32], strides = [1, 1]} : vector<2x128xf32> to vector<2x32xf32>
    %72 = arith.mulf %69, %56 : vector<2x32xf32>
    %73 = arith.mulf %68, %71 : vector<2x32xf32>
    %74 = arith.addf %72, %73 : vector<2x32xf32>
    %75 = math.tanh %74 : vector<2x32xf32>
    %76 = arith.mulf %70, %75 : vector<2x32xf32>
    %77 = vector.extract_strided_slice %19 {offsets = [6, 0], sizes = [2, 128], strides = [1, 1]} : vector<16x128xf32> to vector<2x128xf32>
    %cst_24 = arith.constant dense<0.000000e+00> : vector<2x128xf32>
    %78 = tpu.matmul %76, %20, %cst_24 {dimension_numbers = #tpu.dot_dimension_numbers<[1], [0], [0], [1], [0, 0, 1, 1], [], []>} : vector<2x32xf32>, vector<32x128xf32>, vector<2x128xf32> -> vector<2x128xf32>
    %79 = arith.addf %77, %78 : vector<2x128xf32>
    %80 = arith.negf %79 : vector<2x128xf32>
    %81 = math.exp %80 : vector<2x128xf32>
    %cst_25 = arith.constant 1.000000e+00 : f32
    %82 = vector.broadcast %cst_25 : f32 to vector<2x128xf32>
    %83 = arith.addf %82, %81 : vector<2x128xf32>
    %84 = arith.divf %82, %83 : vector<2x128xf32>
    %85 = math.tanh %79 : vector<2x128xf32>
    %86 = vector.extract_strided_slice %84 {offsets = [0, 0], sizes = [2, 32], strides = [1, 1]} : vector<2x128xf32> to vector<2x32xf32>
    %87 = vector.extract_strided_slice %84 {offsets = [0, 32], sizes = [2, 32], strides = [1, 1]} : vector<2x128xf32> to vector<2x32xf32>
    %88 = vector.extract_strided_slice %84 {offsets = [0, 96], sizes = [2, 32], strides = [1, 1]} : vector<2x128xf32> to vector<2x32xf32>
    %89 = vector.extract_strided_slice %85 {offsets = [0, 64], sizes = [2, 32], strides = [1, 1]} : vector<2x128xf32> to vector<2x32xf32>
    %90 = arith.mulf %87, %74 : vector<2x32xf32>
    %91 = arith.mulf %86, %89 : vector<2x32xf32>
    %92 = arith.addf %90, %91 : vector<2x32xf32>
    %93 = math.tanh %92 : vector<2x32xf32>
    %94 = arith.mulf %88, %93 : vector<2x32xf32>
    %95 = vector.extract_strided_slice %19 {offsets = [8, 0], sizes = [2, 128], strides = [1, 1]} : vector<16x128xf32> to vector<2x128xf32>
    %cst_26 = arith.constant dense<0.000000e+00> : vector<2x128xf32>
    %96 = tpu.matmul %94, %20, %cst_26 {dimension_numbers = #tpu.dot_dimension_numbers<[1], [0], [0], [1], [0, 0, 1, 1], [], []>} : vector<2x32xf32>, vector<32x128xf32>, vector<2x128xf32> -> vector<2x128xf32>
    %97 = arith.addf %95, %96 : vector<2x128xf32>
    %98 = arith.negf %97 : vector<2x128xf32>
    %99 = math.exp %98 : vector<2x128xf32>
    %cst_27 = arith.constant 1.000000e+00 : f32
    %100 = vector.broadcast %cst_27 : f32 to vector<2x128xf32>
    %101 = arith.addf %100, %99 : vector<2x128xf32>
    %102 = arith.divf %100, %101 : vector<2x128xf32>
    %103 = math.tanh %97 : vector<2x128xf32>
    %104 = vector.extract_strided_slice %102 {offsets = [0, 0], sizes = [2, 32], strides = [1, 1]} : vector<2x128xf32> to vector<2x32xf32>
    %105 = vector.extract_strided_slice %102 {offsets = [0, 32], sizes = [2, 32], strides = [1, 1]} : vector<2x128xf32> to vector<2x32xf32>
    %106 = vector.extract_strided_slice %102 {offsets = [0, 96], sizes = [2, 32], strides = [1, 1]} : vector<2x128xf32> to vector<2x32xf32>
    %107 = vector.extract_strided_slice %103 {offsets = [0, 64], sizes = [2, 32], strides = [1, 1]} : vector<2x128xf32> to vector<2x32xf32>
    %108 = arith.mulf %105, %92 : vector<2x32xf32>
    %109 = arith.mulf %104, %107 : vector<2x32xf32>
    %110 = arith.addf %108, %109 : vector<2x32xf32>
    %111 = math.tanh %110 : vector<2x32xf32>
    %112 = arith.mulf %106, %111 : vector<2x32xf32>
    %113 = vector.extract_strided_slice %19 {offsets = [10, 0], sizes = [2, 128], strides = [1, 1]} : vector<16x128xf32> to vector<2x128xf32>
    %cst_28 = arith.constant dense<0.000000e+00> : vector<2x128xf32>
    %114 = tpu.matmul %112, %20, %cst_28 {dimension_numbers = #tpu.dot_dimension_numbers<[1], [0], [0], [1], [0, 0, 1, 1], [], []>} : vector<2x32xf32>, vector<32x128xf32>, vector<2x128xf32> -> vector<2x128xf32>
    %115 = arith.addf %113, %114 : vector<2x128xf32>
    %116 = arith.negf %115 : vector<2x128xf32>
    %117 = math.exp %116 : vector<2x128xf32>
    %cst_29 = arith.constant 1.000000e+00 : f32
    %118 = vector.broadcast %cst_29 : f32 to vector<2x128xf32>
    %119 = arith.addf %118, %117 : vector<2x128xf32>
    %120 = arith.divf %118, %119 : vector<2x128xf32>
    %121 = math.tanh %115 : vector<2x128xf32>
    %122 = vector.extract_strided_slice %120 {offsets = [0, 0], sizes = [2, 32], strides = [1, 1]} : vector<2x128xf32> to vector<2x32xf32>
    %123 = vector.extract_strided_slice %120 {offsets = [0, 32], sizes = [2, 32], strides = [1, 1]} : vector<2x128xf32> to vector<2x32xf32>
    %124 = vector.extract_strided_slice %120 {offsets = [0, 96], sizes = [2, 32], strides = [1, 1]} : vector<2x128xf32> to vector<2x32xf32>
    %125 = vector.extract_strided_slice %121 {offsets = [0, 64], sizes = [2, 32], strides = [1, 1]} : vector<2x128xf32> to vector<2x32xf32>
    %126 = arith.mulf %123, %110 : vector<2x32xf32>
    %127 = arith.mulf %122, %125 : vector<2x32xf32>
    %128 = arith.addf %126, %127 : vector<2x32xf32>
    %129 = math.tanh %128 : vector<2x32xf32>
    %130 = arith.mulf %124, %129 : vector<2x32xf32>
    %131 = vector.extract_strided_slice %19 {offsets = [12, 0], sizes = [2, 128], strides = [1, 1]} : vector<16x128xf32> to vector<2x128xf32>
    %cst_30 = arith.constant dense<0.000000e+00> : vector<2x128xf32>
    %132 = tpu.matmul %130, %20, %cst_30 {dimension_numbers = #tpu.dot_dimension_numbers<[1], [0], [0], [1], [0, 0, 1, 1], [], []>} : vector<2x32xf32>, vector<32x128xf32>, vector<2x128xf32> -> vector<2x128xf32>
    %133 = arith.addf %131, %132 : vector<2x128xf32>
    %134 = arith.negf %133 : vector<2x128xf32>
    %135 = math.exp %134 : vector<2x128xf32>
    %cst_31 = arith.constant 1.000000e+00 : f32
    %136 = vector.broadcast %cst_31 : f32 to vector<2x128xf32>
    %137 = arith.addf %136, %135 : vector<2x128xf32>
    %138 = arith.divf %136, %137 : vector<2x128xf32>
    %139 = math.tanh %133 : vector<2x128xf32>
    %140 = vector.extract_strided_slice %138 {offsets = [0, 0], sizes = [2, 32], strides = [1, 1]} : vector<2x128xf32> to vector<2x32xf32>
    %141 = vector.extract_strided_slice %138 {offsets = [0, 32], sizes = [2, 32], strides = [1, 1]} : vector<2x128xf32> to vector<2x32xf32>
    %142 = vector.extract_strided_slice %138 {offsets = [0, 96], sizes = [2, 32], strides = [1, 1]} : vector<2x128xf32> to vector<2x32xf32>
    %143 = vector.extract_strided_slice %139 {offsets = [0, 64], sizes = [2, 32], strides = [1, 1]} : vector<2x128xf32> to vector<2x32xf32>
    %144 = arith.mulf %141, %128 : vector<2x32xf32>
    %145 = arith.mulf %140, %143 : vector<2x32xf32>
    %146 = arith.addf %144, %145 : vector<2x32xf32>
    %147 = math.tanh %146 : vector<2x32xf32>
    %148 = arith.mulf %142, %147 : vector<2x32xf32>
    %149 = vector.extract_strided_slice %19 {offsets = [14, 0], sizes = [2, 128], strides = [1, 1]} : vector<16x128xf32> to vector<2x128xf32>
    %cst_32 = arith.constant dense<0.000000e+00> : vector<2x128xf32>
    %150 = tpu.matmul %148, %20, %cst_32 {dimension_numbers = #tpu.dot_dimension_numbers<[1], [0], [0], [1], [0, 0, 1, 1], [], []>} : vector<2x32xf32>, vector<32x128xf32>, vector<2x128xf32> -> vector<2x128xf32>
    %151 = arith.addf %149, %150 : vector<2x128xf32>
    %152 = arith.negf %151 : vector<2x128xf32>
    %153 = math.exp %152 : vector<2x128xf32>
    %cst_33 = arith.constant 1.000000e+00 : f32
    %154 = vector.broadcast %cst_33 : f32 to vector<2x128xf32>
    %155 = arith.addf %154, %153 : vector<2x128xf32>
    %156 = arith.divf %154, %155 : vector<2x128xf32>
    %157 = math.tanh %151 : vector<2x128xf32>
    %158 = vector.extract_strided_slice %156 {offsets = [0, 0], sizes = [2, 32], strides = [1, 1]} : vector<2x128xf32> to vector<2x32xf32>
    %159 = vector.extract_strided_slice %156 {offsets = [0, 32], sizes = [2, 32], strides = [1, 1]} : vector<2x128xf32> to vector<2x32xf32>
    %160 = vector.extract_strided_slice %156 {offsets = [0, 96], sizes = [2, 32], strides = [1, 1]} : vector<2x128xf32> to vector<2x32xf32>
    %161 = vector.extract_strided_slice %157 {offsets = [0, 64], sizes = [2, 32], strides = [1, 1]} : vector<2x128xf32> to vector<2x32xf32>
    %162 = arith.mulf %159, %146 : vector<2x32xf32>
    %163 = arith.mulf %158, %161 : vector<2x32xf32>
    %164 = arith.addf %162, %163 : vector<2x32xf32>
    %165 = math.tanh %164 : vector<2x32xf32>
    %166 = arith.mulf %160, %165 : vector<2x32xf32>
    %167 = tpu.concatenate %40, %58, %76, %94, %112, %130, %148, %166 in 0 : vector<2x32xf32>, vector<2x32xf32>, vector<2x32xf32>, vector<2x32xf32>, vector<2x32xf32>, vector<2x32xf32>, vector<2x32xf32>, vector<2x32xf32> -> vector<16x32xf32>
    %c0_34 = arith.constant 0 : index
    %c0_35 = arith.constant 0 : index
    %168 = vector.load %arg7[%c0_34, %c0_35] : memref<32x16xf32, #tpu.memory_space<vmem>>, vector<32x16xf32>
    %cst_36 = arith.constant dense<0.000000e+00> : vector<16x16xf32>
    %169 = tpu.matmul %167, %168, %cst_36 {dimension_numbers = #tpu.dot_dimension_numbers<[1], [0], [0], [1], [0, 0, 1, 1], [], []>} : vector<16x32xf32>, vector<32x16xf32>, vector<16x16xf32> -> vector<16x16xf32>
    %170 = math.tanh %169 : vector<16x16xf32>
    %c0_37 = arith.constant 0 : index
    %c0_38 = arith.constant 0 : index
    %171 = vector.load %arg8[%c0_37, %c0_38] : memref<16x1xf32, #tpu.memory_space<vmem>>, vector<16x1xf32>
    %cst_39 = arith.constant dense<0.000000e+00> : vector<16x1xf32>
    %172 = tpu.matmul %170, %171, %cst_39 {dimension_numbers = #tpu.dot_dimension_numbers<[1], [0], [0], [1], [0, 0, 1, 1], [], []>} : vector<16x16xf32>, vector<16x1xf32>, vector<16x1xf32> -> vector<16x1xf32>
    %173 = vector.extract_strided_slice %172 {offsets = [0, 0], sizes = [2, 1], strides = [1, 1]} : vector<16x1xf32> to vector<2x1xf32>
    %174 = vector.extract_strided_slice %172 {offsets = [2, 0], sizes = [2, 1], strides = [1, 1]} : vector<16x1xf32> to vector<2x1xf32>
    %175 = vector.extract_strided_slice %172 {offsets = [4, 0], sizes = [2, 1], strides = [1, 1]} : vector<16x1xf32> to vector<2x1xf32>
    %176 = vector.extract_strided_slice %172 {offsets = [6, 0], sizes = [2, 1], strides = [1, 1]} : vector<16x1xf32> to vector<2x1xf32>
    %177 = vector.extract_strided_slice %172 {offsets = [8, 0], sizes = [2, 1], strides = [1, 1]} : vector<16x1xf32> to vector<2x1xf32>
    %178 = vector.extract_strided_slice %172 {offsets = [10, 0], sizes = [2, 1], strides = [1, 1]} : vector<16x1xf32> to vector<2x1xf32>
    %179 = vector.extract_strided_slice %172 {offsets = [12, 0], sizes = [2, 1], strides = [1, 1]} : vector<16x1xf32> to vector<2x1xf32>
    %180 = vector.extract_strided_slice %172 {offsets = [14, 0], sizes = [2, 1], strides = [1, 1]} : vector<16x1xf32> to vector<2x1xf32>
    %181 = tpu.concatenate %173, %174, %175, %176, %177, %178, %179, %180 in 1 : vector<2x1xf32>, vector<2x1xf32>, vector<2x1xf32>, vector<2x1xf32>, vector<2x1xf32>, vector<2x1xf32>, vector<2x1xf32>, vector<2x1xf32> -> vector<2x8xf32>
    %cst_40 = arith.constant dense<0xFF800000> : vector<2xf32>
    %182 = vector.multi_reduction <maximumf>, %181, %cst_40 [1] : vector<2x8xf32> to vector<2xf32>
    %183 = vector.shape_cast %182 : vector<2xf32> to vector<2x1xf32>
    %184 = vector.broadcast %183 : vector<2x1xf32> to vector<2x8xf32>
    %185 = arith.subf %181, %184 : vector<2x8xf32>
    %186 = math.exp %185 : vector<2x8xf32>
    %cst_41 = arith.constant dense<0.000000e+00> : vector<2xf32>
    %187 = vector.multi_reduction <add>, %186, %cst_41 [1] : vector<2x8xf32> to vector<2xf32>
    %188 = vector.shape_cast %187 : vector<2xf32> to vector<2x1xf32>
    %189 = tpu.reciprocal %188 {approx = true} : vector<2x1xf32> -> vector<2x1xf32>
    %190 = vector.broadcast %189 : vector<2x1xf32> to vector<2x8xf32>
    %191 = arith.mulf %186, %190 : vector<2x8xf32>
    %cst_42 = arith.constant 0.000000e+00 : f32
    %192 = vector.broadcast %cst_42 : f32 to vector<2x32xf32>
    %193 = vector.extract_strided_slice %191 {offsets = [0, 0], sizes = [2, 1], strides = [1, 1]} : vector<2x8xf32> to vector<2x1xf32>
    %194 = vector.broadcast %193 : vector<2x1xf32> to vector<2x32xf32>
    %195 = arith.mulf %194, %40 : vector<2x32xf32>
    %196 = arith.addf %192, %195 : vector<2x32xf32>
    %197 = vector.extract_strided_slice %191 {offsets = [0, 1], sizes = [2, 1], strides = [1, 1]} : vector<2x8xf32> to vector<2x1xf32>
    %198 = vector.broadcast %197 : vector<2x1xf32> to vector<2x32xf32>
    %199 = arith.mulf %198, %58 : vector<2x32xf32>
    %200 = arith.addf %196, %199 : vector<2x32xf32>
    %201 = vector.extract_strided_slice %191 {offsets = [0, 2], sizes = [2, 1], strides = [1, 1]} : vector<2x8xf32> to vector<2x1xf32>
    %202 = vector.broadcast %201 : vector<2x1xf32> to vector<2x32xf32>
    %203 = arith.mulf %202, %76 : vector<2x32xf32>
    %204 = arith.addf %200, %203 : vector<2x32xf32>
    %205 = vector.extract_strided_slice %191 {offsets = [0, 3], sizes = [2, 1], strides = [1, 1]} : vector<2x8xf32> to vector<2x1xf32>
    %206 = vector.broadcast %205 : vector<2x1xf32> to vector<2x32xf32>
    %207 = arith.mulf %206, %94 : vector<2x32xf32>
    %208 = arith.addf %204, %207 : vector<2x32xf32>
    %209 = vector.extract_strided_slice %191 {offsets = [0, 4], sizes = [2, 1], strides = [1, 1]} : vector<2x8xf32> to vector<2x1xf32>
    %210 = vector.broadcast %209 : vector<2x1xf32> to vector<2x32xf32>
    %211 = arith.mulf %210, %112 : vector<2x32xf32>
    %212 = arith.addf %208, %211 : vector<2x32xf32>
    %213 = vector.extract_strided_slice %191 {offsets = [0, 5], sizes = [2, 1], strides = [1, 1]} : vector<2x8xf32> to vector<2x1xf32>
    %214 = vector.broadcast %213 : vector<2x1xf32> to vector<2x32xf32>
    %215 = arith.mulf %214, %130 : vector<2x32xf32>
    %216 = arith.addf %212, %215 : vector<2x32xf32>
    %217 = vector.extract_strided_slice %191 {offsets = [0, 6], sizes = [2, 1], strides = [1, 1]} : vector<2x8xf32> to vector<2x1xf32>
    %218 = vector.broadcast %217 : vector<2x1xf32> to vector<2x32xf32>
    %219 = arith.mulf %218, %148 : vector<2x32xf32>
    %220 = arith.addf %216, %219 : vector<2x32xf32>
    %221 = vector.extract_strided_slice %191 {offsets = [0, 7], sizes = [2, 1], strides = [1, 1]} : vector<2x8xf32> to vector<2x1xf32>
    %222 = vector.broadcast %221 : vector<2x1xf32> to vector<2x32xf32>
    %223 = arith.mulf %222, %166 : vector<2x32xf32>
    %224 = arith.addf %220, %223 : vector<2x32xf32>
    %225 = vector.shape_cast %224 : vector<2x32xf32> to vector<1x2x32xf32>
    %c0_43 = arith.constant 0 : index
    %c0_44 = arith.constant 0 : index
    %c0_45 = arith.constant 0 : index
    %226 = vector.load %arg9[%c0_43, %c0_44, %c0_45] : memref<1x2x32xf32, #tpu.memory_space<vmem>>, vector<1x2x32xf32>
    tpu.vector_store %arg9[%c0_43, %c0_44, %c0_45], %225 {strides = array<i32>} : memref<1x2x32xf32, #tpu.memory_space<vmem>>, vector<1x2x32xf32>,
    return
  }
}

</mosaic_0001>

<llo_original>
// kernel: tpu_custom_call.1
$region0: #{tpu_custom_call.1}
  #allocation0 [shape = 'u32[]', space=smem, size = 0x4, offset = 0x4, fixed_abs, tag = 'smem constant byte address 0x4 - core index']
  #allocation1 [shape = 'u32[72,128]{1,0:T(1,128)}', space=vmem, size = 0x9000, scoped, tag = 'internal scratch']
  %s0 = inlined_call_operand.vmem [shape: s32[16,1], index: 0, kind: input, shape index: {}]
  %s1 = inlined_call_operand.vmem [shape: f32[50,16], index: 1, kind: input, shape index: {}]
  %s2 = inlined_call_operand.vmem [shape: f32[16,32], index: 2, kind: input, shape index: {}]
  %s3 = inlined_call_operand.vmem [shape: f32[1,32], index: 3, kind: input, shape index: {}]
  %s4 = inlined_call_operand.vmem [shape: f32[32,128], index: 4, kind: input, shape index: {}]
  %s5 = inlined_call_operand.vmem [shape: f32[32,128], index: 5, kind: input, shape index: {}]
  %s6 = inlined_call_operand.vmem [shape: f32[1,128], index: 6, kind: input, shape index: {}]
  %s7 = inlined_call_operand.vmem [shape: f32[32,16], index: 7, kind: input, shape index: {}]
  %s8 = inlined_call_operand.vmem [shape: f32[16,1], index: 8, kind: input, shape index: {}]
  %s9 = inlined_call_operand.hbm [shape: f32[1,2,32], index: 9, kind: output, shape index: {}]
  %s10 = sld [smem:[#allocation0]]
  $region46: #{tpu_custom_call.1} parent=0
    _
  %s12 = ssub.s32 1, %s10
  %s13 = scalar_select 0, %s12, %s10
  $region1: #{tpu_custom_call.1} parent=0
    #allocation2 [shape = 'u8[1024]{0}', space=vmem, size = 0x400, scoped, tag = 'output window, operand 0, single buffered']
    #allocation3 [shape = 's32[1]{0}', space=sflag, size = 0x4, scoped, tag = 'scoped memory for tpu_custom_call.1']
    %14 = vsyncpa [#allocation3], 0
    // Predicated region
    $region2: #{tpu_custom_call.1} parent=1 // pred_check
      _
    $region3: #{tpu_custom_call.1} parent=1 // pred_check_branch
      %16 = sbr.rel (0) target = $region5
    $region4: #{tpu_custom_call.1} parent=1 // pred_region
      _
    $region5: #{tpu_custom_call.1} parent=1 // pred_fallthru
      _
    // Predicated region
    $region6: #{tpu_custom_call.1} parent=1 // pred_check
      _
    $region7: #{tpu_custom_call.1} parent=1 // pred_check_branch
      %18 = sbr.rel (0) target = $region9
    $region8: #{tpu_custom_call.1} parent=1 // pred_region
      _
    $region9: #{tpu_custom_call.1} parent=1 // pred_fallthru
      _
    // Predicated region
    $region10: #{tpu_custom_call.1} parent=1 // pred_check
      _
    $region11: #{tpu_custom_call.1} parent=1 // pred_check_branch
      %20 = sbr.rel (0) target = $region13
    $region12: #{tpu_custom_call.1} parent=1 // pred_region
      _
    $region13: #{tpu_custom_call.1} parent=1 // pred_fallthru
      _
    // Predicated region
    $region14: #{tpu_custom_call.1} parent=1 // pred_check
      _
    $region15: #{tpu_custom_call.1} parent=1 // pred_check_branch
      %22 = sbr.rel (0) target = $region17
    $region16: #{tpu_custom_call.1} parent=1 // pred_region
      _
    $region17: #{tpu_custom_call.1} parent=1 // pred_fallthru
      _
    // Predicated region
    $region18: #{tpu_custom_call.1} parent=1 // pred_check
      _
    $region19: #{tpu_custom_call.1} parent=1 // pred_check_branch
      %24 = sbr.rel (0) target = $region21
    $region20: #{tpu_custom_call.1} parent=1 // pred_region
      _
    $region21: #{tpu_custom_call.1} parent=1 // pred_fallthru
      _
    // Predicated region
    $region22: #{tpu_custom_call.1} parent=1 // pred_check
      _
    $region23: #{tpu_custom_call.1} parent=1 // pred_check_branch
      %26 = sbr.rel (0) target = $region25
    $region24: #{tpu_custom_call.1} parent=1 // pred_region
      _
    $region25: #{tpu_custom_call.1} parent=1 // pred_fallthru
      _
    // Predicated region
    $region26: #{tpu_custom_call.1} parent=1 // pred_check
      _
    $region27: #{tpu_custom_call.1} parent=1 // pred_check_branch
      %28 = sbr.rel (0) target = $region29
    $region28: #{tpu_custom_call.1} parent=1 // pred_region
      _
    $region29: #{tpu_custom_call.1} parent=1 // pred_fallthru
      _
    // Predicated region
    $region30: #{tpu_custom_call.1} parent=1 // pred_check
      _
    $region31: #{tpu_custom_call.1} parent=1 // pred_check_branch
      %30 = sbr.rel (0) target = $region33
    $region32: #{tpu_custom_call.1} parent=1 // pred_region
      _
    $region33: #{tpu_custom_call.1} parent=1 // pred_fallthru
      _
    // Predicated region
    $region34: #{tpu_custom_call.1} parent=1 // pred_check
      _
    $region35: #{tpu_custom_call.1} parent=1 // pred_check_branch
      %32 = sbr.rel (0) target = $region37
    $region36: #{tpu_custom_call.1} parent=1 // pred_region
      _
    $region37: #{tpu_custom_call.1} parent=1 // pred_fallthru
      _
    %v33 = vld [vmem:[%s0] sm:$0xff]
    %v34 = vld [vmem:[%s0 + $0x8] sm:$0xff]
    %v35 = vlaneseq
    %v36 = vand.u32 %v35, 127
    %37 = vset.pattern.permute.xlu0 0
    %38 = vperm.xlu0 %37, %v33
    %v39 = vpop.permute.xlu0 %38
    %40 = vset.pattern.permute.xlu0 0
    %41 = vperm.xlu0 %40, %v34
    %v42 = vpop.permute.xlu0 %41
    %vm43 = vcmp.eq.s32.totalorder %v39, %v36
    %vm44 = vcmp.eq.s32.totalorder %v42, %v36
    %v45 = vsel %vm43, 1, 0
    %v46 = vsel %vm44, 1, 0
    %v47 = vcvt.s32.f32 %v45
    %v48 = vcvt.s32.f32 %v46
    %v49 = vld [vmem:[%s1] sm:$0xff]
    %v50 = vld [vmem:[%s1 + $0x8] sm:$0xff]
    %v51 = vld [vmem:[%s1 + $0x10] sm:$0xff]
    %v52 = vld [vmem:[%s1 + $0x18] sm:$0xff]
    %v53 = vld [vmem:[%s1 + $0x20] sm:$0xff]
    %v54 = vld [vmem:[%s1 + $0x28] sm:$0xff]
    %v55 = vld [vmem:[%s1 + $0x30] sm:$0x3]
    %vm56 = vcmask 408576
    %v58 = vsel %vm56, %v47, 0
    %v61 = vsel %vm56, %v48, 0
    %vm63 = vcmask 1041408
    %v65 = vsel %vm63, %v55, 0
    %67 = vmatpush.msra.mxu0 0.0
    %68 = vmatpush.msra.mxu0 0.0
    %69 = vmatpush.msra.mxu0 0.0
    %70 = vmatpush.msra.mxu0 0.0
    %71 = vmatpush.msra.mxu0 0.0
    %72 = vmatpush.msra.mxu0 0.0
    %73 = vmatpush.msra.mxu0 0.0
    %74 = vmatpush.msra.mxu0 0.0
    %75 = vmatpush.msra.mxu0 0.0
    %76 = vmatpush.msra.mxu0 %v65
    %77 = vmatpush.msra.mxu0 %v54
    %78 = vmatpush.msra.mxu0 %v53
    %79 = vmatpush.msra.mxu0 %v52
    %80 = vmatpush.msra.mxu0 %v51
    %81 = vmatpush.msra.mxu0 %v50
    %82 = vmatpush.msra.mxu0 %v49
    %83 = vmatmul.f32.gmra.mxu0 %v58
    %v84 = vpop.f32.mrf.mxu0
    %v85 = vadd.f32 0.0, %v84
    %86 = vmatmul.f32.gmra.mxu0 %v61
    %v87 = vpop.f32.mrf.mxu0
    %v88 = vadd.f32 0.0, %v87
    %89 = vdwg.mxu0
    %v90 = vld [vmem:[%s2] sm:$0xff]
    %v91 = vld [vmem:[%s2 + $0x8] sm:$0xff]
    %v92 = vld [vmem:[%s3] sm:$0x1]
    %v94 = vperm.slane %v92, 0
    %vm96 = vcmask 130048
    %v98 = vsel %vm96, %v85, 0
    %v101 = vsel %vm96, %v88, 0
    %103 = vmatpush.msra.mxu0 0.0
    %104 = vmatpush.msra.mxu0 0.0
    %105 = vmatpush.msra.mxu0 0.0
    %106 = vmatpush.msra.mxu0 0.0
    %107 = vmatpush.msra.mxu0 0.0
    %108 = vmatpush.msra.mxu0 0.0
    %109 = vmatpush.msra.mxu0 0.0
    %110 = vmatpush.msra.mxu0 0.0
    %111 = vmatpush.msra.mxu0 0.0
    %112 = vmatpush.msra.mxu0 0.0
    %113 = vmatpush.msra.mxu0 0.0
    %114 = vmatpush.msra.mxu0 0.0
    %115 = vmatpush.msra.mxu0 0.0
    %116 = vmatpush.msra.mxu0 0.0
    %117 = vmatpush.msra.mxu0 %v91
    %118 = vmatpush.msra.mxu0 %v90
    %119 = vmatmul.f32.gmra.mxu0 %v98
    %v120 = vpop.f32.mrf.mxu0
    %v121 = vadd.f32 %v94, %v120
    %122 = vmatmul.f32.gmra.mxu0 %v101
    %v123 = vpop.f32.mrf.mxu0
    %v124 = vadd.f32 %v94, %v123
    %125 = vdwg.mxu0
    %v126 = vmax.f32 %v121, 0.0
    %v127 = vmax.f32 %v124, 0.0
    %v128 = vld [vmem:[%s4] sm:$0xff]
    %v129 = vld [vmem:[%s4 + $0x8] sm:$0xff]
    %v130 = vld [vmem:[%s4 + $0x10] sm:$0xff]
    %v131 = vld [vmem:[%s4 + $0x18] sm:$0xff]
    %v132 = vld [vmem:[%s6] sm:$0x1]
    %v134 = vperm.slane %v132, 0
    %vm136 = vcmask 261120
    %v138 = vsel %vm136, %v126, 0
    %v141 = vsel %vm136, %v127, 0
    %143 = vmatpush.msra.mxu0 0.0
    %144 = vmatpush.msra.mxu0 0.0
    %145 = vmatpush.msra.mxu0 0.0
    %146 = vmatpush.msra.mxu0 0.0
    %147 = vmatpush.msra.mxu0 0.0
    %148 = vmatpush.msra.mxu0 0.0
    %149 = vmatpush.msra.mxu0 0.0
    %150 = vmatpush.msra.mxu0 0.0
    %151 = vmatpush.msra.mxu0 0.0
    %152 = vmatpush.msra.mxu0 0.0
    %153 = vmatpush.msra.mxu0 0.0
    %154 = vmatpush.msra.mxu0 0.0
    %155 = vmatpush.msra.mxu0 %v131
    %156 = vmatpush.msra.mxu0 %v130
    %157 = vmatpush.msra.mxu0 %v129
    %158 = vmatpush.msra.mxu0 %v128
    %159 = vmatmul.f32.gmra.mxu0 %v138
    %v160 = vpop.f32.mrf.mxu0
    %v161 = vadd.f32 %v134, %v160
    %162 = vmatmul.f32.gmra.mxu0 %v141
    %v163 = vpop.f32.mrf.mxu0
    %v164 = vadd.f32 %v134, %v163
    %165 = vdwg.mxu0
    %v166 = vld [vmem:[%s5] sm:$0xff]
    %v167 = vld [vmem:[%s5 + $0x8] sm:$0xff]
    %v168 = vld [vmem:[%s5 + $0x10] sm:$0xff]
    %v169 = vld [vmem:[%s5 + $0x18] sm:$0xff]
    %v171 = vsel %vm136, 0.0, 0
    %173 = vmatpush.msra.mxu0 0.0
    %174 = vmatpush.msra.mxu0 0.0
    %175 = vmatpush.msra.mxu0 0.0
    %176 = vmatpush.msra.mxu0 0.0
    %177 = vmatpush.msra.mxu0 0.0
    %178 = vmatpush.msra.mxu0 0.0
    %179 = vmatpush.msra.mxu0 0.0
    %180 = vmatpush.msra.mxu0 0.0
    %181 = vmatpush.msra.mxu0 0.0
    %182 = vmatpush.msra.mxu0 0.0
    %183 = vmatpush.msra.mxu0 0.0
    %184 = vmatpush.msra.mxu0 0.0
    %185 = vmatpush.msra.mxu0 %v169
    %186 = vmatpush.msra.mxu0 %v168
    %187 = vmatpush.msra.mxu0 %v167
    %188 = vmatpush.msra.mxu0 %v166
    %189 = vmatmul.f32.gmra.mxu0 %v171
    %v190 = vpop.f32.mrf.mxu0
    %v191 = vadd.f32 0.0, %v190
    %192 = vdwg.mxu0
    %v193 = vadd.f32 %v161, %v191
    %v194 = vxor.u32 %v193, 2147483648
    %v195 = vmul.f32 %v194, 1.442695
    %v196 = vpow.pop %v195
    %v197 = vadd.f32 %v196, 1.0
    %v198 = vrcp.pop %v197
    %v199 = vmul.f32 %v197, %v198
    %v200 = vsub.f32 1.0, %v199
    %v201 = vmul.f32 %v198, %v200
    %v202 = vadd.f32 %v198, %v201
    %vm203 = vweird.f32 %v197
    %vm204 = vweird.f32 %v198
    %vm205 = vmor %vm203, %vm204
    %v206 = vsel %vm205, %v198, %v202
    %v207 = vand.u32 2147483647, %v197
    %vm208 = vcmp.eq.f32.partialorder %v207, 8.507059e+37
    %v209 = vand.u32 %v197, 2147483648
    %v210 = vor.u32 1.1754944e-38, %v209
    %v211 = vsel %vm208, %v210, %v206
    %v212 = vmul.f32 1.0, %v211
    %v213 = vtanh.pop %v193
    %v214 = vmul.f32 %v212, 0.0
    %216 = vrot.lane.b32.xlu0 %v213, 64
    %v217 = vpop.permute.xlu0 %216
    %v219 = vmul.f32 %v212, %v217
    %221 = vrot.lane.b32.xlu0 %v219, 32
    %v222 = vpop.permute.xlu0 %221
    %v224 = vadd.f32 %v214, %v222
    %v225 = vtanh.pop %v224
    %227 = vrot.lane.b32.xlu0 %v225, 64
    %v228 = vpop.permute.xlu0 %227
    %v230 = vmul.f32 %v212, %v228
    %232 = vrot.lane.b32.xlu0 %v230, 32
    %v233 = vpop.permute.xlu0 %232
    %v234 = vsel %vm136, %v233, 0
    %236 = vmatpush.msra.mxu0 0.0
    %237 = vmatpush.msra.mxu0 0.0
    %238 = vmatpush.msra.mxu0 0.0
    %239 = vmatpush.msra.mxu0 0.0
    %240 = vmatpush.msra.mxu0 0.0
    %241 = vmatpush.msra.mxu0 0.0
    %242 = vmatpush.msra.mxu0 0.0
    %243 = vmatpush.msra.mxu0 0.0
    %244 = vmatpush.msra.mxu0 0.0
    %245 = vmatpush.msra.mxu0 0.0
    %246 = vmatpush.msra.mxu0 0.0
    %247 = vmatpush.msra.mxu0 0.0
    %248 = vmatpush.msra.mxu0 %v169
    %249 = vmatpush.msra.mxu0 %v168
    %250 = vmatpush.msra.mxu0 %v167
    %251 = vmatpush.msra.mxu0 %v166
    %252 = vmatmul.f32.gmra.mxu0 %v234
    %v253 = vpop.f32.mrf.mxu0
    %v254 = vadd.f32 0.0, %v253
    %255 = vdwg.mxu0
    %v257 = vrot.slane %v254, 6
    %v259 = vadd.f32 %v161, %v257
    %v260 = vxor.u32 %v259, 2147483648
    %v261 = vmul.f32 %v260, 1.442695
    %v262 = vpow.pop %v261
    %v263 = vadd.f32 %v262, 1.0
    %v264 = vrcp.pop %v263
    %v265 = vmul.f32 %v263, %v264
    %v266 = vsub.f32 1.0, %v265
    %v267 = vmul.f32 %v264, %v266
    %v268 = vadd.f32 %v264, %v267
    %vm269 = vweird.f32 %v263
    %vm270 = vweird.f32 %v264
    %vm271 = vmor %vm269, %vm270
    %v272 = vsel %vm271, %v264, %v268
    %v273 = vand.u32 2147483647, %v263
    %vm274 = vcmp.eq.f32.partialorder %v273, 8.507059e+37
    %v275 = vand.u32 %v263, 2147483648
    %v276 = vor.u32 1.1754944e-38, %v275
    %v277 = vsel %vm274, %v276, %v272
    %v278 = vmul.f32 1.0, %v277
    %v279 = vtanh.pop %v259
    %v281 = vrot.slane %v224, 6
    %v283 = vmul.f32 %v278, %v281
    %285 = vrot.lane.b32.xlu0 %v279, 64
    %v286 = vpop.permute.xlu0 %285
    %v288 = vmul.f32 %v278, %v286
    %290 = vrot.lane.b32.xlu0 %v288, 32
    %v291 = vpop.permute.xlu0 %290
    %v293 = vadd.f32 %v283, %v291
    %v294 = vtanh.pop %v293
    %296 = vrot.lane.b32.xlu0 %v294, 64
    %v297 = vpop.permute.xlu0 %296
    %v299 = vmul.f32 %v278, %v297
    %v301 = vrot.slane %v299, 2
    %302 = vrot.lane.b32.xlu0 %v301, 32
    %v303 = vpop.permute.xlu0 %302
    %v304 = vsel %vm136, %v303, 0
    %306 = vmatpush.msra.mxu0 0.0
    %307 = vmatpush.msra.mxu0 0.0
    %308 = vmatpush.msra.mxu0 0.0
    %309 = vmatpush.msra.mxu0 0.0
    %310 = vmatpush.msra.mxu0 0.0
    %311 = vmatpush.msra.mxu0 0.0
    %312 = vmatpush.msra.mxu0 0.0
    %313 = vmatpush.msra.mxu0 0.0
    %314 = vmatpush.msra.mxu0 0.0
    %315 = vmatpush.msra.mxu0 0.0
    %316 = vmatpush.msra.mxu0 0.0
    %317 = vmatpush.msra.mxu0 0.0
    %318 = vmatpush.msra.mxu0 %v169
    %319 = vmatpush.msra.mxu0 %v168
    %320 = vmatpush.msra.mxu0 %v167
    %321 = vmatpush.msra.mxu0 %v166
    %322 = vmatmul.f32.gmra.mxu0 %v304
    %v323 = vpop.f32.mrf.mxu0
    %v324 = vadd.f32 0.0, %v323
    %325 = vdwg.mxu0
    %v327 = vrot.slane %v324, 4
    %v329 = vadd.f32 %v161, %v327
    %v330 = vxor.u32 %v329, 2147483648
    %v331 = vmul.f32 %v330, 1.442695
    %v332 = vpow.pop %v331
    %v333 = vadd.f32 %v332, 1.0
    %v334 = vrcp.pop %v333
    %v335 = vmul.f32 %v333, %v334
    %v336 = vsub.f32 1.0, %v335
    %v337 = vmul.f32 %v334, %v336
    %v338 = vadd.f32 %v334, %v337
    %vm339 = vweird.f32 %v333
    %vm340 = vweird.f32 %v334
    %vm341 = vmor %vm339, %vm340
    %v342 = vsel %vm341, %v334, %v338
    %v343 = vand.u32 2147483647, %v333
    %vm344 = vcmp.eq.f32.partialorder %v343, 8.507059e+37
    %v345 = vand.u32 %v333, 2147483648
    %v346 = vor.u32 1.1754944e-38, %v345
    %v347 = vsel %vm344, %v346, %v342
    %v348 = vmul.f32 1.0, %v347
    %v349 = vtanh.pop %v329
    %v351 = vrot.slane %v293, 6
    %v353 = vmul.f32 %v348, %v351
    %355 = vrot.lane.b32.xlu0 %v349, 64
    %v356 = vpop.permute.xlu0 %355
    %v358 = vmul.f32 %v348, %v356
    %360 = vrot.lane.b32.xlu0 %v358, 32
    %v361 = vpop.permute.xlu0 %360
    %v363 = vadd.f32 %v353, %v361
    %v364 = vtanh.pop %v363
    %366 = vrot.lane.b32.xlu0 %v364, 64
    %v367 = vpop.permute.xlu0 %366
    %v369 = vmul.f32 %v348, %v367
    %v371 = vrot.slane %v369, 4
    %372 = vrot.lane.b32.xlu0 %v371, 32
    %v373 = vpop.permute.xlu0 %372
    %v374 = vsel %vm136, %v373, 0
    %376 = vmatpush.msra.mxu0 0.0
    %377 = vmatpush.msra.mxu0 0.0
    %378 = vmatpush.msra.mxu0 0.0
    %379 = vmatpush.msra.mxu0 0.0
    %380 = vmatpush.msra.mxu0 0.0
    %381 = vmatpush.msra.mxu0 0.0
    %382 = vmatpush.msra.mxu0 0.0
    %383 = vmatpush.msra.mxu0 0.0
    %384 = vmatpush.msra.mxu0 0.0
    %385 = vmatpush.msra.mxu0 0.0
    %386 = vmatpush.msra.mxu0 0.0
    %387 = vmatpush.msra.mxu0 0.0
    %388 = vmatpush.msra.mxu0 %v169
    %389 = vmatpush.msra.mxu0 %v168
    %390 = vmatpush.msra.mxu0 %v167
    %391 = vmatpush.msra.mxu0 %v166
    %392 = vmatmul.f32.gmra.mxu0 %v374
    %v393 = vpop.f32.mrf.mxu0
    %v394 = vadd.f32 0.0, %v393
    %395 = vdwg.mxu0
    %v397 = vrot.slane %v394, 2
    %v399 = vadd.f32 %v161, %v397
    %v400 = vxor.u32 %v399, 2147483648
    %v401 = vmul.f32 %v400, 1.442695
    %v402 = vpow.pop %v401
    %v403 = vadd.f32 %v402, 1.0
    %v404 = vrcp.pop %v403
    %v405 = vmul.f32 %v403, %v404
    %v406 = vsub.f32 1.0, %v405
    %v407 = vmul.f32 %v404, %v406
    %v408 = vadd.f32 %v404, %v407
    %vm409 = vweird.f32 %v403
    %vm410 = vweird.f32 %v404
    %vm411 = vmor %vm409, %vm410
    %v412 = vsel %vm411, %v404, %v408
    %v413 = vand.u32 2147483647, %v403
    %vm414 = vcmp.eq.f32.partialorder %v413, 8.507059e+37
    %v415 = vand.u32 %v403, 2147483648
    %v416 = vor.u32 1.1754944e-38, %v415
    %v417 = vsel %vm414, %v416, %v412
    %v418 = vmul.f32 1.0, %v417
    %v419 = vtanh.pop %v399
    %v421 = vrot.slane %v363, 6
    %v423 = vmul.f32 %v418, %v421
    %425 = vrot.lane.b32.xlu0 %v419, 64
    %v426 = vpop.permute.xlu0 %425
    %v428 = vmul.f32 %v418, %v426
    %430 = vrot.lane.b32.xlu0 %v428, 32
    %v431 = vpop.permute.xlu0 %430
    %v433 = vadd.f32 %v423, %v431
    %v434 = vtanh.pop %v433
    %436 = vrot.lane.b32.xlu0 %v434, 64
    %v437 = vpop.permute.xlu0 %436
    %v439 = vmul.f32 %v418, %v437
    %v441 = vrot.slane %v439, 6
    %442 = vrot.lane.b32.xlu0 %v441, 32
    %v443 = vpop.permute.xlu0 %442
    %v444 = vsel %vm136, %v443, 0
    %446 = vmatpush.msra.mxu0 0.0
    %447 = vmatpush.msra.mxu0 0.0
    %448 = vmatpush.msra.mxu0 0.0
    %449 = vmatpush.msra.mxu0 0.0
    %450 = vmatpush.msra.mxu0 0.0
    %451 = vmatpush.msra.mxu0 0.0
    %452 = vmatpush.msra.mxu0 0.0
    %453 = vmatpush.msra.mxu0 0.0
    %454 = vmatpush.msra.mxu0 0.0
    %455 = vmatpush.msra.mxu0 0.0
    %456 = vmatpush.msra.mxu0 0.0
    %457 = vmatpush.msra.mxu0 0.0
    %458 = vmatpush.msra.mxu0 %v169
    %459 = vmatpush.msra.mxu0 %v168
    %460 = vmatpush.msra.mxu0 %v167
    %461 = vmatpush.msra.mxu0 %v166
    %462 = vmatmul.f32.gmra.mxu0 %v444
    %v463 = vpop.f32.mrf.mxu0
    %v464 = vadd.f32 0.0, %v463
    %465 = vdwg.mxu0
    %v466 = vadd.f32 %v164, %v464
    %v467 = vxor.u32 %v466, 2147483648
    %v468 = vmul.f32 %v467, 1.442695
    %v469 = vpow.pop %v468
    %v470 = vadd.f32 %v469, 1.0
    %v471 = vrcp.pop %v470
    %v472 = vmul.f32 %v470, %v471
    %v473 = vsub.f32 1.0, %v472
    %v474 = vmul.f32 %v471, %v473
    %v475 = vadd.f32 %v471, %v474
    %vm476 = vweird.f32 %v470
    %vm477 = vweird.f32 %v471
    %vm478 = vmor %vm476, %vm477
    %v479 = vsel %vm478, %v471, %v475
    %v480 = vand.u32 2147483647, %v470
    %vm481 = vcmp.eq.f32.partialorder %v480, 8.507059e+37
    %v482 = vand.u32 %v470, 2147483648
    %v483 = vor.u32 1.1754944e-38, %v482
    %v484 = vsel %vm481, %v483, %v479
    %v485 = vmul.f32 1.0, %v484
    %v486 = vtanh.pop %v466
    %v488 = vrot.slane %v433, 6
    %v490 = vmul.f32 %v485, %v488
    %492 = vrot.lane.b32.xlu0 %v486, 64
    %v493 = vpop.permute.xlu0 %492
    %v495 = vmul.f32 %v485, %v493
    %497 = vrot.lane.b32.xlu0 %v495, 32
    %v498 = vpop.permute.xlu0 %497
    %v500 = vadd.f32 %v490, %v498
    %v501 = vtanh.pop %v500
    %503 = vrot.lane.b32.xlu0 %v501, 64
    %v504 = vpop.permute.xlu0 %503
    %v506 = vmul.f32 %v485, %v504
    %508 = vrot.lane.b32.xlu0 %v506, 32
    %v509 = vpop.permute.xlu0 %508
    %v510 = vsel %vm136, %v509, 0
    %512 = vmatpush.msra.mxu0 0.0
    %513 = vmatpush.msra.mxu0 0.0
    %514 = vmatpush.msra.mxu0 0.0
    %515 = vmatpush.msra.mxu0 0.0
    %516 = vmatpush.msra.mxu0 0.0
    %517 = vmatpush.msra.mxu0 0.0
    %518 = vmatpush.msra.mxu0 0.0
    %519 = vmatpush.msra.mxu0 0.0
    %520 = vmatpush.msra.mxu0 0.0
    %521 = vmatpush.msra.mxu0 0.0
    %522 = vmatpush.msra.mxu0 0.0
    %523 = vmatpush.msra.mxu0 0.0
    %524 = vmatpush.msra.mxu0 %v169
    %525 = vmatpush.msra.mxu0 %v168
    %526 = vmatpush.msra.mxu0 %v167
    %527 = vmatpush.msra.mxu0 %v166
    %528 = vmatmul.f32.gmra.mxu0 %v510
    %v529 = vpop.f32.mrf.mxu0
    %v530 = vadd.f32 0.0, %v529
    %531 = vdwg.mxu0
    %v533 = vrot.slane %v530, 6
    %v535 = vadd.f32 %v164, %v533
    %v536 = vxor.u32 %v535, 2147483648
    %v537 = vmul.f32 %v536, 1.442695
    %v538 = vpow.pop %v537
    %v539 = vadd.f32 %v538, 1.0
    %v540 = vrcp.pop %v539
    %v541 = vmul.f32 %v539, %v540
    %v542 = vsub.f32 1.0, %v541
    %v543 = vmul.f32 %v540, %v542
    %v544 = vadd.f32 %v540, %v543
    %vm545 = vweird.f32 %v539
    %vm546 = vweird.f32 %v540
    %vm547 = vmor %vm545, %vm546
    %v548 = vsel %vm547, %v540, %v544
    %v549 = vand.u32 2147483647, %v539
    %vm550 = vcmp.eq.f32.partialorder %v549, 8.507059e+37
    %v551 = vand.u32 %v539, 2147483648
    %v552 = vor.u32 1.1754944e-38, %v551
    %v553 = vsel %vm550, %v552, %v548
    %v554 = vmul.f32 1.0, %v553
    %v555 = vtanh.pop %v535
    %v557 = vrot.slane %v500, 6
    %v559 = vmul.f32 %v554, %v557
    %561 = vrot.lane.b32.xlu0 %v555, 64
    %v562 = vpop.permute.xlu0 %561
    %v564 = vmul.f32 %v554, %v562
    %566 = vrot.lane.b32.xlu0 %v564, 32
    %v567 = vpop.permute.xlu0 %566
    %v569 = vadd.f32 %v559, %v567
    %v570 = vtanh.pop %v569
    %572 = vrot.lane.b32.xlu0 %v570, 64
    %v573 = vpop.permute.xlu0 %572
    %v575 = vmul.f32 %v554, %v573
    %v577 = vrot.slane %v575, 2
    %578 = vrot.lane.b32.xlu0 %v577, 32
    %v579 = vpop.permute.xlu0 %578
    %v580 = vsel %vm136, %v579, 0
    %582 = vmatpush.msra.mxu0 0.0
    %583 = vmatpush.msra.mxu0 0.0
    %584 = vmatpush.msra.mxu0 0.0
    %585 = vmatpush.msra.mxu0 0.0
    %586 = vmatpush.msra.mxu0 0.0
    %587 = vmatpush.msra.mxu0 0.0
    %588 = vmatpush.msra.mxu0 0.0
    %589 = vmatpush.msra.mxu0 0.0
    %590 = vmatpush.msra.mxu0 0.0
    %591 = vmatpush.msra.mxu0 0.0
    %592 = vmatpush.msra.mxu0 0.0
    %593 = vmatpush.msra.mxu0 0.0
    %594 = vmatpush.msra.mxu0 %v169
    %595 = vmatpush.msra.mxu0 %v168
    %596 = vmatpush.msra.mxu0 %v167
    %597 = vmatpush.msra.mxu0 %v166
    %598 = vmatmul.f32.gmra.mxu0 %v580
    %v599 = vpop.f32.mrf.mxu0
    %v600 = vadd.f32 0.0, %v599
    %601 = vdwg.mxu0
    %v603 = vrot.slane %v600, 4
    %v605 = vadd.f32 %v164, %v603
    %v606 = vxor.u32 %v605, 2147483648
    %v607 = vmul.f32 %v606, 1.442695
    %v608 = vpow.pop %v607
    %v609 = vadd.f32 %v608, 1.0
    %v610 = vrcp.pop %v609
    %v611 = vmul.f32 %v609, %v610
    %v612 = vsub.f32 1.0, %v611
    %v613 = vmul.f32 %v610, %v612
    %v614 = vadd.f32 %v610, %v613
    %vm615 = vweird.f32 %v609
    %vm616 = vweird.f32 %v610
    %vm617 = vmor %vm615, %vm616
    %v618 = vsel %vm617, %v610, %v614
    %v619 = vand.u32 2147483647, %v609
    %vm620 = vcmp.eq.f32.partialorder %v619, 8.507059e+37
    %v621 = vand.u32 %v609, 2147483648
    %v622 = vor.u32 1.1754944e-38, %v621
    %v623 = vsel %vm620, %v622, %v618
    %v624 = vmul.f32 1.0, %v623
    %v625 = vtanh.pop %v605
    %v627 = vrot.slane %v569, 6
    %v629 = vmul.f32 %v624, %v627
    %631 = vrot.lane.b32.xlu0 %v625, 64
    %v632 = vpop.permute.xlu0 %631
    %v634 = vmul.f32 %v624, %v632
    %636 = vrot.lane.b32.xlu0 %v634, 32
    %v637 = vpop.permute.xlu0 %636
    %v639 = vadd.f32 %v629, %v637
    %v640 = vtanh.pop %v639
    %642 = vrot.lane.b32.xlu0 %v640, 64
    %v643 = vpop.permute.xlu0 %642
    %v645 = vmul.f32 %v624, %v643
    %v647 = vrot.slane %v645, 4
    %648 = vrot.lane.b32.xlu0 %v647, 32
    %v649 = vpop.permute.xlu0 %648
    %v650 = vsel %vm136, %v649, 0
    %652 = vmatpush.msra.mxu0 0.0
    %653 = vmatpush.msra.mxu0 0.0
    %654 = vmatpush.msra.mxu0 0.0
    %655 = vmatpush.msra.mxu0 0.0
    %656 = vmatpush.msra.mxu0 0.0
    %657 = vmatpush.msra.mxu0 0.0
    %658 = vmatpush.msra.mxu0 0.0
    %659 = vmatpush.msra.mxu0 0.0
    %660 = vmatpush.msra.mxu0 0.0
    %661 = vmatpush.msra.mxu0 0.0
    %662 = vmatpush.msra.mxu0 0.0
    %663 = vmatpush.msra.mxu0 0.0
    %664 = vmatpush.msra.mxu0 %v169
    %665 = vmatpush.msra.mxu0 %v168
    %666 = vmatpush.msra.mxu0 %v167
    %667 = vmatpush.msra.mxu0 %v166
    %668 = vmatmul.f32.gmra.mxu0 %v650
    %v669 = vpop.f32.mrf.mxu0
    %v670 = vadd.f32 0.0, %v669
    %671 = vdwg.mxu0
    %v673 = vrot.slane %v670, 2
    %v675 = vadd.f32 %v164, %v673
    %v676 = vxor.u32 %v675, 2147483648
    %v677 = vmul.f32 %v676, 1.442695
    %v678 = vpow.pop %v677
    %v679 = vadd.f32 %v678, 1.0
    %v680 = vrcp.pop %v679
    %v681 = vmul.f32 %v679, %v680
    %v682 = vsub.f32 1.0, %v681
    %v683 = vmul.f32 %v680, %v682
    %v684 = vadd.f32 %v680, %v683
    %vm685 = vweird.f32 %v679
    %vm686 = vweird.f32 %v680
    %vm687 = vmor %vm685, %vm686
    %v688 = vsel %vm687, %v680, %v684
    %v689 = vand.u32 2147483647, %v679
    %vm690 = vcmp.eq.f32.partialorder %v689, 8.507059e+37
    %v691 = vand.u32 %v679, 2147483648
    %v692 = vor.u32 1.1754944e-38, %v691
    %v693 = vsel %vm690, %v692, %v688
    %v694 = vmul.f32 1.0, %v693
    %v695 = vtanh.pop %v675
    %v697 = vrot.slane %v639, 6
    %v699 = vmul.f32 %v694, %v697
    %701 = vrot.lane.b32.xlu0 %v695, 64
    %v702 = vpop.permute.xlu0 %701
    %v704 = vmul.f32 %v694, %v702
    %706 = vrot.lane.b32.xlu0 %v704, 32
    %v707 = vpop.permute.xlu0 %706
    %v709 = vadd.f32 %v699, %v707
    %v710 = vtanh.pop %v709
    %712 = vrot.lane.b32.xlu0 %v710, 64
    %v713 = vpop.permute.xlu0 %712
    %v715 = vmul.f32 %v694, %v713
    %v716 = vsel %vm63, %v230, %v299
    %vm717 = vcmask 1043456
    %v718 = vsel %vm717, %v716, %v369
    %vm719 = vcmask 1045504
    %v720 = vsel %vm719, %v718, %v439
    %v721 = vsel %vm63, %v506, %v575
    %v722 = vsel %vm717, %v721, %v645
    %v723 = vsel %vm719, %v722, %v715
    %v724 = vld [vmem:[%s7] sm:$0xff]
    %v725 = vld [vmem:[%s7 + $0x8] sm:$0xff]
    %v726 = vld [vmem:[%s7 + $0x10] sm:$0xff]
    %v727 = vld [vmem:[%s7 + $0x18] sm:$0xff]
    %730 = vrot.lane.b32.xlu0 %v720, 32
    %v731 = vpop.permute.xlu0 %730
    %732 = vrot.lane.b32.xlu0 %v723, 32
    %v733 = vpop.permute.xlu0 %732
    %v734 = vsel %vm136, %v731, 0
    %v736 = vsel %vm136, %v733, 0
    %738 = vmatpush.msra.mxu0 0.0
    %739 = vmatpush.msra.mxu0 0.0
    %740 = vmatpush.msra.mxu0 0.0
    %741 = vmatpush.msra.mxu0 0.0
    %742 = vmatpush.msra.mxu0 0.0
    %743 = vmatpush.msra.mxu0 0.0
    %744 = vmatpush.msra.mxu0 0.0
    %745 = vmatpush.msra.mxu0 0.0
    %746 = vmatpush.msra.mxu0 0.0
    %747 = vmatpush.msra.mxu0 0.0
    %748 = vmatpush.msra.mxu0 0.0
    %749 = vmatpush.msra.mxu0 0.0
    %750 = vmatpush.msra.mxu0 %v727
    %751 = vmatpush.msra.mxu0 %v726
    %752 = vmatpush.msra.mxu0 %v725
    %753 = vmatpush.msra.mxu0 %v724
    %754 = vmatmul.f32.gmra.mxu0 %v734
    %v755 = vpop.f32.mrf.mxu0
    %v756 = vadd.f32 0.0, %v755
    %757 = vmatmul.f32.gmra.mxu0 %v736
    %v758 = vpop.f32.mrf.mxu0
    %v759 = vadd.f32 0.0, %v758
    %760 = vdwg.mxu0
    %v761 = vtanh.pop %v756
    %v762 = vtanh.pop %v759
    %v763 = vld [vmem:[%s8] sm:$0xff]
    %v764 = vld [vmem:[%s8 + $0x8] sm:$0xff]
    %v766 = vsel %vm96, %v761, 0
    %v769 = vsel %vm96, %v762, 0
    %771 = vmatpush.msra.mxu0 0.0
    %772 = vmatpush.msra.mxu0 0.0
    %773 = vmatpush.msra.mxu0 0.0
    %774 = vmatpush.msra.mxu0 0.0
    %775 = vmatpush.msra.mxu0 0.0
    %776 = vmatpush.msra.mxu0 0.0
    %777 = vmatpush.msra.mxu0 0.0
    %778 = vmatpush.msra.mxu0 0.0
    %779 = vmatpush.msra.mxu0 0.0
    %780 = vmatpush.msra.mxu0 0.0
    %781 = vmatpush.msra.mxu0 0.0
    %782 = vmatpush.msra.mxu0 0.0
    %783 = vmatpush.msra.mxu0 0.0
    %784 = vmatpush.msra.mxu0 0.0
    %785 = vmatpush.msra.mxu0 %v764
    %786 = vmatpush.msra.mxu0 %v763
    %787 = vmatmul.f32.gmra.mxu0 %v766
    %v788 = vpop.f32.mrf.mxu0
    %v789 = vadd.f32 0.0, %v788
    %790 = vmatmul.f32.gmra.mxu0 %v769
    %v791 = vpop.f32.mrf.mxu0
    %v792 = vadd.f32 0.0, %v791
    %793 = vdwg.mxu0
    %v795 = vrot.slane %v789, 2
    %796 = vrot.lane.b32.xlu0 %v795, 1
    %v797 = vpop.permute.xlu0 %796
    %v799 = vrot.slane %v789, 4
    %800 = vrot.lane.b32.xlu0 %v799, 2
    %v801 = vpop.permute.xlu0 %800
    %v803 = vrot.slane %v789, 6
    %804 = vrot.lane.b32.xlu0 %v803, 3
    %v805 = vpop.permute.xlu0 %804
    %808 = vrot.lane.b32.xlu0 %v792, 4
    %v809 = vpop.permute.xlu0 %808
    %v811 = vrot.slane %v792, 2
    %812 = vrot.lane.b32.xlu0 %v811, 5
    %v813 = vpop.permute.xlu0 %812
    %v815 = vrot.slane %v792, 4
    %816 = vrot.lane.b32.xlu0 %v815, 6
    %v817 = vpop.permute.xlu0 %816
    %v819 = vrot.slane %v792, 6
    %820 = vrot.lane.b32.xlu0 %v819, 7
    %v821 = vpop.permute.xlu0 %820
    %vm823 = vcmask 7168
    %v824 = vsel %vm823, %v789, %v797
    %vm825 = vcmask 15360
    %v826 = vsel %vm825, %v824, %v801
    %vm827 = vcmask 23552
    %v828 = vsel %vm827, %v826, %v805
    %vm829 = vcmask 31744
    %v830 = vsel %vm829, %v828, %v809
    %vm831 = vcmask 39936
    %v832 = vsel %vm831, %v830, %v813
    %vm833 = vcmask 48128
    %v834 = vsel %vm833, %v832, %v817
    %vm835 = vcmask 56320
    %v836 = vsel %vm835, %v834, %v821
    %vm837 = vcmask 58368
    %v838 = vsel %vm837, %v836, -inf
    %839 = vmax.xlane.f32.xlu0 %v838
    %v840 = vpop.xlane.xlu0 %839
    %v841 = vsub.f32 %v836, %v840
    %v842 = vmul.f32 %v841, 1.442695
    %v843 = vpow.pop %v842
    %v844 = vsel %vm837, %v843, 0.0
    %845 = vadd.xlane.f32.xlu0 %v844
    %v846 = vpop.xlane.xlu0 %845
    %v847 = vrcp.pop %v846
    %v848 = vmul.f32 %v843, %v847
    %850 = vset.pattern.permute.xlu0 0
    %851 = vperm.xlu0 %850, %v848
    %v852 = vpop.permute.xlu0 %851
    %v854 = vmul.f32 %v852, %v230
    %v855 = vadd.f32 %v854, 0.0
    %856 = vset.pattern.permute.xlu0 1
    %857 = vperm.xlu0 %856, %v848
    %v858 = vpop.permute.xlu0 %857
    %v861 = vmul.f32 %v858, %v303
    %863 = vrot.lane.b32.xlu0 %v861, 96
    %v864 = vpop.permute.xlu0 %863
    %v866 = vadd.f32 %v855, %v864
    %867 = vset.pattern.permute.xlu0 2
    %868 = vperm.xlu0 %867, %v848
    %v869 = vpop.permute.xlu0 %868
    %v872 = vmul.f32 %v869, %v373
    %874 = vrot.lane.b32.xlu0 %v872, 96
    %v875 = vpop.permute.xlu0 %874
    %v877 = vadd.f32 %v866, %v875
    %878 = vset.pattern.permute.xlu0 3
    %879 = vperm.xlu0 %878, %v848
    %v880 = vpop.permute.xlu0 %879
    %v883 = vmul.f32 %v880, %v443
    %885 = vrot.lane.b32.xlu0 %v883, 96
    %v886 = vpop.permute.xlu0 %885
    %v888 = vadd.f32 %v877, %v886
    %889 = vset.pattern.permute.xlu0 4
    %890 = vperm.xlu0 %889, %v848
    %v891 = vpop.permute.xlu0 %890
    %v893 = vmul.f32 %v891, %v506
    %v894 = vadd.f32 %v888, %v893
    %895 = vset.pattern.permute.xlu0 5
    %896 = vperm.xlu0 %895, %v848
    %v897 = vpop.permute.xlu0 %896
    %v900 = vmul.f32 %v897, %v579
    %902 = vrot.lane.b32.xlu0 %v900, 96
    %v903 = vpop.permute.xlu0 %902
    %v905 = vadd.f32 %v894, %v903
    %906 = vset.pattern.permute.xlu0 6
    %907 = vperm.xlu0 %906, %v848
    %v908 = vpop.permute.xlu0 %907
    %v911 = vmul.f32 %v908, %v649
    %913 = vrot.lane.b32.xlu0 %v911, 96
    %v914 = vpop.permute.xlu0 %913
    %v916 = vadd.f32 %v905, %v914
    %917 = vset.pattern.permute.xlu0 7
    %918 = vperm.xlu0 %917, %v848
    %v919 = vpop.permute.xlu0 %918
    %v922 = vrot.slane %v715, 6
    %923 = vrot.lane.b32.xlu0 %v922, 32
    %v924 = vpop.permute.xlu0 %923
    %v926 = vmul.f32 %v919, %v924
    %928 = vrot.lane.b32.xlu0 %v926, 96
    %v929 = vpop.permute.xlu0 %928
    %v931 = vadd.f32 %v916, %v929
    %933 = vrot.lane.b32.xlu0 %v931, 32
    %v934 = vpop.permute.xlu0 %933
    %vm936 = vcmask 254976
    %937 = vst.msk [vmem:[#allocation2] sm:$0x3] %vm936, %v934
    // Predicated region
    $region38: #{tpu_custom_call.1} parent=1 // pred_check
      _
    $region39: #{tpu_custom_call.1} parent=1 // pred_check_branch
      %939 = sbr.rel (0) target = $region41
    $region40: #{tpu_custom_call.1} parent=1 // pred_region
      %941 = vsyncadd [#allocation3], 0
      %s943 = sshll.u32 [#allocation2], 4
      %s944 = int_to_ptr.vmem [resolvable:$true] %s943
      %s945 = sshll.u32 %s9, 4
      %s946 = int_to_ptr.hbm [resolvable:$true] %s945
      %948 = dma.vmem_to_hbm [thread:$0]  %s944, 32, %s946, [#allocation3]
    $region41: #{tpu_custom_call.1} parent=1 // pred_fallthru
      _
    // Predicated region
    $region42: #{tpu_custom_call.1} parent=1 // pred_check
      _
    $region43: #{tpu_custom_call.1} parent=1 // pred_check_branch
      %950 = sbr.rel (0) target = $region45
    $region44: #{tpu_custom_call.1} parent=1 // pred_region
      %952 = dma.done [#allocation3], 32
    $region45: #{tpu_custom_call.1} parent=1 // pred_fallthru
      _
    %953 = vsyncpa [#allocation3], 1

</llo_original>
